<compile_context>
chip_gen: v7x
topology: tpu7x:2x2x1
jax: 0.10.0
libtpu: 0.0.40
codegen_flags: <defaults>
</compile_context>

<pallas_src>
import functools

import jax
import jax.numpy as jnp
from jax.experimental import pallas as pl
from jax.experimental.pallas import tpu as pltpu


# ---------------------------------------------------------------------------
# Kernels
# ---------------------------------------------------------------------------

def ffn_kernel_fused(x_ref, w1_ref, b1_ref, w2_ref, b2_ref, g_ref, beta_ref,
                     o_ref, *, eps):
    """Single-pass kernel: full F is resident, grid = (M tiles,)."""
    mx_dtype = w1_ref.dtype
    x_f32 = x_ref[...].astype(jnp.float32)

    # 1x1 conv == linear: bf16 MXU inputs, f32 accumulation.
    h = jnp.dot(x_f32.astype(mx_dtype), w1_ref[...],
                preferred_element_type=jnp.float32)
    h = jnp.maximum(h + b1_ref[...].astype(jnp.float32), 0.0)
    y = jnp.dot(h.astype(mx_dtype), w2_ref[...],
                preferred_element_type=jnp.float32)

    # Residual + LayerNorm, fully in f32, two-pass variance.
    z = x_f32 + y + b2_ref[...].astype(jnp.float32)
    mean = jnp.mean(z, axis=-1, keepdims=True)
    zc = z - mean
    var = jnp.mean(zc * zc, axis=-1, keepdims=True)
    normed = zc * jax.lax.rsqrt(var + eps)
    o_ref[...] = (normed * g_ref[...].astype(jnp.float32)
                  + beta_ref[...].astype(jnp.float32)).astype(o_ref.dtype)


def ffn_kernel_tiled(x_ref, w1_ref, b1_ref, w2_ref, b2_ref, g_ref, beta_ref,
                     o_ref, acc_ref, xmx_ref, *, eps):
    """F-tiled kernel: grid = (M tiles [parallel], F tiles [arbitrary])."""
    j = pl.program_id(1)

    # Init once per M tile: f32 accumulator = residual + output bias, and cache
    # the bf16 cast of the x tile so it isn't re-loaded/re-cast every F step.
    @pl.when(j == 0)
    def _init():
        x_f32 = x_ref[...].astype(jnp.float32)
        acc_ref[...] = x_f32 + b2_ref[...].astype(jnp.float32)
        xmx_ref[...] = x_f32.astype(xmx_ref.dtype)

    h = jnp.dot(xmx_ref[...], w1_ref[...], preferred_element_type=jnp.float32)
    h = jnp.maximum(h + b1_ref[...].astype(jnp.float32), 0.0)
    acc_ref[...] += jnp.dot(h.astype(xmx_ref.dtype), w2_ref[...],
                            preferred_element_type=jnp.float32)

    # Finalize: LayerNorm over the channel dim, f32, two-pass variance.
    @pl.when(j == pl.num_programs(1) - 1)
    def _finalize():
        z = acc_ref[...]
        mean = jnp.mean(z, axis=-1, keepdims=True)
        zc = z - mean
        var = jnp.mean(zc * zc, axis=-1, keepdims=True)
        normed = zc * jax.lax.rsqrt(var + eps)
        o_ref[...] = (normed * g_ref[...].astype(jnp.float32)
                      + beta_ref[...].astype(jnp.float32)).astype(o_ref.dtype)


# ---------------------------------------------------------------------------
# Tiling helpers
# ---------------------------------------------------------------------------

def _round_up(n, m):
    return ((n + m - 1) // m) * m


def _choose_tile_m(n, desired):
    """Pick an M tile that divides N (avoids pad/slice HBM round trips) when a
    reasonably sized aligned divisor exists; otherwise fall back to padding."""
    desired = max(16, desired)
    if n <= desired:
        return n, False                       # full dim: no pad, no alignment need
    floor = max(64, desired // 4)
    for align in (16, 8):
        start = (desired // align) * align
        for t in range(start, align - 1, -align):
            if t < floor:
                break
            if n % t == 0:
                return t, False
    return (desired // 16) * 16 or 16, True   # ragged: pad N up to a multiple


def _choose_tile_f(f, desired):
    """Largest multiple-of-128 divisor of F that is <= desired (else full F)."""
    if f <= desired or f % 128 != 0:
        return f
    start = (desired // 128) * 128
    for t in range(start, 127, -128):
        if f % t == 0:
            return t
    return f


# ---------------------------------------------------------------------------
# Wrapper
# ---------------------------------------------------------------------------

def positional_wise_feed_forward(x, w1, b1, w2, b2, gamma, beta, *,
                                 tile_m=512, tile_f=512,
                                 matmul_dtype=jnp.bfloat16, eps=1e-5):
    """x: (B, L, D). w1: (D, F), w2: (F, D). Returns (B, L, D).

    Matmuls run on `matmul_dtype` (bf16 by default) MXU inputs with f32
    accumulation; residual + LayerNorm are done in f32.
    """
    B, L, D = x.shape
    Dw, F = w1.shape
    assert Dw == D and w2.shape == (F, D)

    N = B * L
    x_bytes = x.dtype.itemsize
    w_bytes = jnp.dtype(matmul_dtype).itemsize

    # --- VMEM budget (v7x-safe: use the chip's real capacity minus headroom) ---
    try:
        vmem_cap = int(pltpu.get_tpu_info().vmem_capacity_bytes)
    except Exception:
        vmem_cap = 64 * 1024 * 1024            # conservative (v7x per-TC)
    vmem_budget = max(16 * 1024 * 1024, vmem_cap - 8 * 1024 * 1024)

    # --- weight residency decision ---
    weight_bytes = 2 * D * F * w_bytes         # W1 + W2 in matmul dtype
    weights_resident = weight_bytes <= vmem_budget // 3
    if weights_resident:
        tile_f = F
    else:
        tile_f = _choose_tile_f(F, tile_f)
    n_f = F // tile_f

    def _vmem_est(tm, tf):
        est = (2 * tm * D * x_bytes            # x tiles (double-buffered)
               + 2 * tm * D * x_bytes          # out tiles (double-buffered)
               + 2 * 2 * D * tf * w_bytes      # W1 + W2 slabs (double-buffered)
               + tm * tf * 4                   # h intermediate (f32)
               + (1 << 20))                    # biases + LN params + slack
        if n_f > 1:
            est += tm * D * 4                  # f32 accumulator scratch
            est += tm * D * w_bytes            # cached bf16 x scratch
        return est

    # When weights stream, push tile_m past the v6e roofline knee; shrink until
    # the VMEM estimate fits the budget.
    desired_m = tile_m if weights_resident else max(tile_m, 1024)
    while desired_m > 64 and _vmem_est(min(desired_m, N), tile_f) > vmem_budget:
        desired_m //= 2
    tile_m, needs_pad = _choose_tile_m(N, desired_m)

    n_m = pl.cdiv(N, tile_m)
    n_pad = n_m * tile_m

    x2 = x.reshape(N, D)
    if needs_pad and n_pad != N:
        x2 = jnp.pad(x2, ((0, n_pad - N), (0, 0)))

    # Weights live in the MXU input dtype (halves resident VMEM footprint).
    w1_mx = w1.astype(matmul_dtype)
    w2_mx = w2.astype(matmul_dtype)
    b1_2 = b1.reshape(1, F).astype(jnp.float32)
    b2_2 = b2.reshape(1, D).astype(jnp.float32)
    g_2 = gamma.reshape(1, D).astype(jnp.float32)
    beta_2 = beta.reshape(1, D).astype(jnp.float32)

    w_stream_factor = 1 if n_f == 1 else n_m
    cost = pl.CostEstimate(
        flops=4 * n_pad * D * F,                              # two (N,D,F) matmuls
        transcendentals=n_pad,                                # one rsqrt per row
        bytes_accessed=(2 * n_pad * D * x_bytes               # x in + out
                        + w_stream_factor * weight_bytes      # actual weight traffic
                        + (F + 3 * D) * 4))                   # biases + LN params

    vmem_est = _vmem_est(tile_m, tile_f)
    vmem_limit = int(min(vmem_budget, max(32 * 1024 * 1024, 2 * vmem_est)))
    vmem_limit = max(vmem_limit, vmem_est)

    if n_f == 1:
        # Fused single-pass kernel: weights grid-resident (DMA'd once), no
        # accumulator scratch, no pl.when phases.
        grid_spec = pltpu.PrefetchScalarGridSpec(
            num_scalar_prefetch=0,
            grid=(n_m,),
            in_specs=[
                pl.BlockSpec((tile_m, D), lambda i: (i, 0)),   # x tile
                pl.BlockSpec((D, F), lambda i: (0, 0)),        # W1 (resident)
                pl.BlockSpec((1, F), lambda i: (0, 0)),        # b1
                pl.BlockSpec((F, D), lambda i: (0, 0)),        # W2 (resident)
                pl.BlockSpec((1, D), lambda i: (0, 0)),        # b2
                pl.BlockSpec((1, D), lambda i: (0, 0)),        # LN gamma
                pl.BlockSpec((1, D), lambda i: (0, 0)),        # LN beta
            ],
            out_specs=pl.BlockSpec((tile_m, D), lambda i: (i, 0)),
        )
        kernel = functools.partial(ffn_kernel_fused, eps=eps)
        dim_sem = ("parallel",)
    else:
        grid_spec = pltpu.PrefetchScalarGridSpec(
            num_scalar_prefetch=0,
            grid=(n_m, n_f),
            in_specs=[
                pl.BlockSpec((tile_m, D), lambda i, j: (i, 0)),   # x tile
                pl.BlockSpec((D, tile_f), lambda i, j: (0, j)),   # W1 slab
                pl.BlockSpec((1, tile_f), lambda i, j: (0, j)),   # b1 slab
                pl.BlockSpec((tile_f, D), lambda i, j: (j, 0)),   # W2 slab
                pl.BlockSpec((1, D), lambda i, j: (0, 0)),        # b2
                pl.BlockSpec((1, D), lambda i, j: (0, 0)),        # LN gamma
                pl.BlockSpec((1, D), lambda i, j: (0, 0)),        # LN beta
            ],
            out_specs=pl.BlockSpec((tile_m, D), lambda i, j: (i, 0)),
            scratch_shapes=[pltpu.VMEM((tile_m, D), jnp.float32),   # f32 accumulator
                            pltpu.VMEM((tile_m, D), matmul_dtype)], # cached bf16 x
        )
        kernel = functools.partial(ffn_kernel_tiled, eps=eps)
        dim_sem = ("parallel", "arbitrary")

    out2 = pl.pallas_call(
        kernel,
        out_shape=jax.ShapeDtypeStruct((n_pad, D), x.dtype),
        grid_spec=grid_spec,
        compiler_params=pltpu.CompilerParams(
            dimension_semantics=dim_sem,
            vmem_limit_bytes=vmem_limit),
        cost_estimate=cost,
    )(x2, w1_mx, b1_2, w2_mx, b2_2, g_2, beta_2)

    if n_pad != N:
        out2 = out2[:N]
    return out2.reshape(B, L, D)


# ---------------------------------------------------------------------------
# Demo / correctness check
# ---------------------------------------------------------------------------

if __name__ == "__main__":
    # small shapes consistent with the module; model_dim == ffn_dim (see NOTE above)
    B, L, D = 2, 16, 128
    Fdim = D  # ffn_dim

    key = jax.random.PRNGKey(0)
    kx, kw1, kb1, kw2, kb2 = jax.random.split(key, 5)

    x = jax.random.normal(kx, (B, L, D), dtype=jnp.float32)

    # Conv1d(weight: (out_ch, in_ch, 1)) -> stored transposed (in_ch, out_ch) for x @ W
    w1 = jax.random.normal(kw1, (D, Fdim), dtype=jnp.float32) * (1.0 / jnp.sqrt(D))
    b1 = jax.random.normal(kb1, (Fdim,), dtype=jnp.float32) * 0.01
    w2 = jax.random.normal(kw2, (Fdim, D), dtype=jnp.float32) * (1.0 / jnp.sqrt(Fdim))
    b2 = jax.random.normal(kb2, (D,), dtype=jnp.float32) * 0.01

    # LayerNorm params (default init: ones / zeros)
    gamma = jnp.ones((D,), dtype=jnp.float32)
    beta = jnp.zeros((D,), dtype=jnp.float32)

    out = positional_wise_feed_forward(x, w1, b1, w2, b2, gamma, beta)
    jax.block_until_ready(out)
    assert out.shape == (B, L, D)

    # pure-JAX reference check (mirrors the kernel's bf16-MXU / f32-accumulate path)
    xb = x.astype(jnp.bfloat16)
    w1b = w1.astype(jnp.bfloat16)
    w2b = w2.astype(jnp.bfloat16)
    h = jnp.einsum("bld,df->blf", xb, w1b, preferred_element_type=jnp.float32) + b1
    h = jnp.maximum(h, 0.0)
    y = jnp.einsum("blf,fd->bld", h.astype(jnp.bfloat16), w2b,
                   preferred_element_type=jnp.float32) + b2
    z = x + y
    mu = jnp.mean(z, axis=-1, keepdims=True)
    var = jnp.mean((z - mu) ** 2, axis=-1, keepdims=True)
    ref = (z - mu) / jnp.sqrt(var + 1e-5) * gamma + beta
    assert jnp.allclose(out, ref, atol=1e-2, rtol=1e-2), "mismatch vs reference"

    print("KERNEL_OK")
</pallas_src>

<mosaic_0001>
module attributes {stable_mosaic.version = 11 : i64} {
  func.func @ffn_kernel_fused(%arg0: i32, %arg1: memref<32x128xf32, #tpu.memory_space<vmem>>, %arg2: memref<128x128xbf16, #tpu.memory_space<vmem>>, %arg3: memref<1x128xf32, #tpu.memory_space<vmem>>, %arg4: memref<128x128xbf16, #tpu.memory_space<vmem>>, %arg5: memref<1x128xf32, #tpu.memory_space<vmem>>, %arg6: memref<1x128xf32, #tpu.memory_space<vmem>>, %arg7: memref<1x128xf32, #tpu.memory_space<vmem>>, %arg8: memref<32x128xf32, #tpu.memory_space<vmem>>) attributes {dimension_semantics = [#tpu.dimension_semantics<parallel>], iteration_bounds = array<i64: 1>, scalar_prefetch = 0 : i64, scratch_operands = 0 : i64, tpu.core_type = #tpu.core_type<tc>, window_params = [{transform_indices = @transform_0, window_bounds = array<i64: 32, 128>}, {pipeline_mode = #tpu.pipeline_mode<synchronous>, transform_indices = @transform_1, window_bounds = array<i64: 128, 128>}, {pipeline_mode = #tpu.pipeline_mode<synchronous>, transform_indices = @transform_2, window_bounds = array<i64: 1, 128>}, {pipeline_mode = #tpu.pipeline_mode<synchronous>, transform_indices = @transform_3, window_bounds = array<i64: 128, 128>}, {pipeline_mode = #tpu.pipeline_mode<synchronous>, transform_indices = @transform_4, window_bounds = array<i64: 1, 128>}, {pipeline_mode = #tpu.pipeline_mode<synchronous>, transform_indices = @transform_5, window_bounds = array<i64: 1, 128>}, {pipeline_mode = #tpu.pipeline_mode<synchronous>, transform_indices = @transform_6, window_bounds = array<i64: 1, 128>}, {transform_indices = @transform_7, window_bounds = array<i64: 32, 128>}]} {
    %c0 = arith.constant 0 : index
    %c0_0 = arith.constant 0 : index
    %0 = vector.load %arg1[%c0, %c0_0] : memref<32x128xf32, #tpu.memory_space<vmem>>, vector<32x128xf32>
    %1 = arith.truncf %0 : vector<32x128xf32> to vector<32x128xbf16>
    %c0_1 = arith.constant 0 : index
    %c0_2 = arith.constant 0 : index
    %2 = vector.load %arg2[%c0_1, %c0_2] : memref<128x128xbf16, #tpu.memory_space<vmem>>, vector<128x128xbf16>
    %cst = arith.constant dense<0.000000e+00> : vector<32x128xf32>
    %3 = tpu.matmul %1, %2, %cst {dimension_numbers = #tpu.dot_dimension_numbers<[1], [0], [0], [1], [0, 0, 1, 1], [], []>} : vector<32x128xbf16>, vector<128x128xbf16>, vector<32x128xf32> -> vector<32x128xf32>
    %c0_3 = arith.constant 0 : index
    %c0_4 = arith.constant 0 : index
    %4 = vector.load %arg3[%c0_3, %c0_4] : memref<1x128xf32, #tpu.memory_space<vmem>>, vector<1x128xf32>
    %5 = vector.broadcast %4 : vector<1x128xf32> to vector<32x128xf32>
    %6 = arith.addf %3, %5 : vector<32x128xf32>
    %cst_5 = arith.constant 0.000000e+00 : f32
    %7 = vector.broadcast %cst_5 : f32 to vector<32x128xf32>
    %8 = arith.maximumf %6, %7 : vector<32x128xf32>
    %9 = arith.truncf %8 : vector<32x128xf32> to vector<32x128xbf16>
    %c0_6 = arith.constant 0 : index
    %c0_7 = arith.constant 0 : index
    %10 = vector.load %arg4[%c0_6, %c0_7] : memref<128x128xbf16, #tpu.memory_space<vmem>>, vector<128x128xbf16>
    %cst_8 = arith.constant dense<0.000000e+00> : vector<32x128xf32>
    %11 = tpu.matmul %9, %10, %cst_8 {dimension_numbers = #tpu.dot_dimension_numbers<[1], [0], [0], [1], [0, 0, 1, 1], [], []>} : vector<32x128xbf16>, vector<128x128xbf16>, vector<32x128xf32> -> vector<32x128xf32>
    %12 = arith.addf %0, %11 : vector<32x128xf32>
    %c0_9 = arith.constant 0 : index
    %c0_10 = arith.constant 0 : index
    %13 = vector.load %arg5[%c0_9, %c0_10] : memref<1x128xf32, #tpu.memory_space<vmem>>, vector<1x128xf32>
    %14 = vector.broadcast %13 : vector<1x128xf32> to vector<32x128xf32>
    %15 = arith.addf %12, %14 : vector<32x128xf32>
    %cst_11 = arith.constant dense<0.000000e+00> : vector<32xf32>
    %16 = vector.multi_reduction <add>, %15, %cst_11 [1] : vector<32x128xf32> to vector<32xf32>
    %17 = vector.shape_cast %16 : vector<32xf32> to vector<32x1xf32>
    %cst_12 = arith.constant 1.280000e+02 : f32
    %18 = vector.broadcast %cst_12 : f32 to vector<32x1xf32>
    %19 = arith.divf %17, %18 : vector<32x1xf32>
    %20 = vector.broadcast %19 : vector<32x1xf32> to vector<32x128xf32>
    %21 = arith.subf %15, %20 : vector<32x128xf32>
    %22 = arith.mulf %21, %21 : vector<32x128xf32>
    %cst_13 = arith.constant dense<0.000000e+00> : vector<32xf32>
    %23 = vector.multi_reduction <add>, %22, %cst_13 [1] : vector<32x128xf32> to vector<32xf32>
    %24 = vector.shape_cast %23 : vector<32xf32> to vector<32x1xf32>
    %cst_14 = arith.constant 1.280000e+02 : f32
    %25 = vector.broadcast %cst_14 : f32 to vector<32x1xf32>
    %26 = arith.divf %24, %25 : vector<32x1xf32>
    %cst_15 = arith.constant 9.99999974E-6 : f32
    %27 = vector.broadcast %cst_15 : f32 to vector<32x1xf32>
    %28 = arith.addf %26, %27 : vector<32x1xf32>
    %29 = math.rsqrt %28 : vector<32x1xf32>
    %30 = vector.broadcast %29 : vector<32x1xf32> to vector<32x128xf32>
    %31 = arith.mulf %21, %30 : vector<32x128xf32>
    %c0_16 = arith.constant 0 : index
    %c0_17 = arith.constant 0 : index
    %32 = vector.load %arg6[%c0_16, %c0_17] : memref<1x128xf32, #tpu.memory_space<vmem>>, vector<1x128xf32>
    %33 = vector.broadcast %32 : vector<1x128xf32> to vector<32x128xf32>
    %34 = arith.mulf %31, %33 : vector<32x128xf32>
    %c0_18 = arith.constant 0 : index
    %c0_19 = arith.constant 0 : index
    %35 = vector.load %arg7[%c0_18, %c0_19] : memref<1x128xf32, #tpu.memory_space<vmem>>, vector<1x128xf32>
    %36 = vector.broadcast %35 : vector<1x128xf32> to vector<32x128xf32>
    %37 = arith.addf %34, %36 : vector<32x128xf32>
    %c0_20 = arith.constant 0 : index
    %c0_21 = arith.constant 0 : index
    %38 = vector.load %arg8[%c0_20, %c0_21] : memref<32x128xf32, #tpu.memory_space<vmem>>, vector<32x128xf32>
    tpu.vector_store %arg8[%c0_20, %c0_21], %37 {strides = array<i32>} : memref<32x128xf32, #tpu.memory_space<vmem>>, vector<32x128xf32>,
    return
  }
  func.func @transform_0(%arg0: i32) -> (i32, i32) {
    %c0_i32 = arith.constant 0 : i32
    %c0_i32_0 = arith.constant 0 : i32
    return %arg0, %c0_i32 : i32, i32
  }
  func.func @transform_1(%arg0: i32) -> (i32, i32) {
    %c0_i32 = arith.constant 0 : i32
    %c0_i32_0 = arith.constant 0 : i32
    %c0_i32_1 = arith.constant 0 : i32
    return %c0_i32, %c0_i32_0 : i32, i32
  }
  func.func @transform_2(%arg0: i32) -> (i32, i32) {
    %c0_i32 = arith.constant 0 : i32
    %c0_i32_0 = arith.constant 0 : i32
    %c0_i32_1 = arith.constant 0 : i32
    return %c0_i32, %c0_i32_0 : i32, i32
  }
  func.func @transform_3(%arg0: i32) -> (i32, i32) {
    %c0_i32 = arith.constant 0 : i32
    %c0_i32_0 = arith.constant 0 : i32
    %c0_i32_1 = arith.constant 0 : i32
    return %c0_i32, %c0_i32_0 : i32, i32
  }
  func.func @transform_4(%arg0: i32) -> (i32, i32) {
    %c0_i32 = arith.constant 0 : i32
    %c0_i32_0 = arith.constant 0 : i32
    %c0_i32_1 = arith.constant 0 : i32
    return %c0_i32, %c0_i32_0 : i32, i32
  }
  func.func @transform_5(%arg0: i32) -> (i32, i32) {
    %c0_i32 = arith.constant 0 : i32
    %c0_i32_0 = arith.constant 0 : i32
    %c0_i32_1 = arith.constant 0 : i32
    return %c0_i32, %c0_i32_0 : i32, i32
  }
  func.func @transform_6(%arg0: i32) -> (i32, i32) {
    %c0_i32 = arith.constant 0 : i32
    %c0_i32_0 = arith.constant 0 : i32
    %c0_i32_1 = arith.constant 0 : i32
    return %c0_i32, %c0_i32_0 : i32, i32
  }
  func.func @transform_7(%arg0: i32) -> (i32, i32) {
    %c0_i32 = arith.constant 0 : i32
    %c0_i32_0 = arith.constant 0 : i32
    return %arg0, %c0_i32 : i32, i32
  }
}

</mosaic_0001>

<llo_original>
// kernel: tpu_custom_call.1
$region0: #{tpu_custom_call.1}
  #allocation0 [shape = 'u32[]', space=smem, size = 0x4, offset = 0x4, fixed_abs, tag = 'smem constant byte address 0x4 - core index']
  #allocation1 [shape = 'u32[144,128]{1,0:T(1,128)}', space=vmem, size = 0x12000, scoped, tag = 'internal scratch']
  %s0 = inlined_call_operand.hbm [shape: f32[32,128], index: 0, kind: input, shape index: {}]
  %s1 = inlined_call_operand.hbm [shape: bf16[128,128], index: 1, kind: input, shape index: {}]
  %s2 = inlined_call_operand.vmem [shape: f32[1,128], index: 2, kind: input, shape index: {}]
  %s3 = inlined_call_operand.hbm [shape: bf16[128,128], index: 3, kind: input, shape index: {}]
  %s4 = inlined_call_operand.vmem [shape: f32[1,128], index: 4, kind: input, shape index: {}]
  %s5 = inlined_call_operand.vmem [shape: f32[1,128], index: 5, kind: input, shape index: {}]
  %s6 = inlined_call_operand.vmem [shape: f32[1,128], index: 6, kind: input, shape index: {}]
  %s7 = inlined_call_operand.hbm [shape: f32[32,128], index: 7, kind: output, shape index: {}]
  %s8 = sld [smem:[#allocation0]]
  $region50: #{tpu_custom_call.1} parent=0
    _
  %s10 = ssub.s32 1, %s8
  %s11 = scalar_select 0, %s10, %s8
  $region1: #{tpu_custom_call.1} parent=0
    #allocation2 [shape = 'u8[16384]{0}', space=vmem, size = 0x4000, scoped, tag = 'input window, operand 0, single buffered']
    #allocation3 [shape = 's32[1]{0}', space=sflag, size = 0x4, scoped, tag = 'scoped memory for tpu_custom_call.1']
    #allocation4 [shape = 's32[1]{0}', space=sflag, size = 0x4, scoped, tag = 'scoped memory for tpu_custom_call.1']
    #allocation5 [shape = 'u8[32768]{0}', space=vmem, size = 0x8000, scoped, tag = 'input window, operand 1, single buffered']
    #allocation6 [shape = 's32[1]{0}', space=sflag, size = 0x4, scoped, tag = 'scoped memory for tpu_custom_call.1']
    #allocation7 [shape = 'u8[32768]{0}', space=vmem, size = 0x8000, scoped, tag = 'input window, operand 3, single buffered']
    #allocation8 [shape = 'u8[16384]{0}', space=vmem, size = 0x4000, scoped, tag = 'output window, operand 0, single buffered']
    %12 = vsyncpa [#allocation3], 0
    %13 = vsyncpa [#allocation6], 0
    %14 = vsyncpa [#allocation4], 0
    // Predicated region
    $region2: #{tpu_custom_call.1} parent=1 // pred_check
      _
    $region3: #{tpu_custom_call.1} parent=1 // pred_check_branch
      %16 = sbr.rel (0) target = $region5
    $region4: #{tpu_custom_call.1} parent=1 // pred_region
      %s18 = ssub.s32 512, 512
      %19 = vsyncadd [#allocation3], %s18
      %s20 = sshll.u32 [#allocation2], 4
      %s21 = int_to_ptr.vmem [resolvable:$true] %s20
      %26 = dma.hbm_to_vmem [thread:$0]  %s0, 512, %s21, [#allocation3], 128, 128, 8
    $region5: #{tpu_custom_call.1} parent=1 // pred_fallthru
      _
    // Predicated region
    $region6: #{tpu_custom_call.1} parent=1 // pred_check
      _
    $region7: #{tpu_custom_call.1} parent=1 // pred_check_branch
      %28 = sbr.rel (0) target = $region9
    $region8: #{tpu_custom_call.1} parent=1 // pred_region
      %s30 = ssub.s32 1024, 1024
      %31 = vsyncadd [#allocation6], %s30
      %s32 = sshll.u32 [#allocation5], 4
      %s33 = int_to_ptr.vmem [resolvable:$true] %s32
      %38 = dma.hbm_to_vmem [thread:$0]  %s1, 1024, %s33, [#allocation6], 64, 64, 4
    $region9: #{tpu_custom_call.1} parent=1 // pred_fallthru
      _
    // Predicated region
    $region10: #{tpu_custom_call.1} parent=1 // pred_check
      _
    $region11: #{tpu_custom_call.1} parent=1 // pred_check_branch
      %40 = sbr.rel (0) target = $region13
    $region12: #{tpu_custom_call.1} parent=1 // pred_region
      _
    $region13: #{tpu_custom_call.1} parent=1 // pred_fallthru
      _
    // Predicated region
    $region14: #{tpu_custom_call.1} parent=1 // pred_check
      _
    $region15: #{tpu_custom_call.1} parent=1 // pred_check_branch
      %42 = sbr.rel (0) target = $region17
    $region16: #{tpu_custom_call.1} parent=1 // pred_region
      %s44 = ssub.s32 1024, 1024
      %45 = vsyncadd [#allocation6], %s44
      %s46 = sshll.u32 [#allocation7], 4
      %s47 = int_to_ptr.vmem [resolvable:$true] %s46
      %52 = dma.hbm_to_vmem [thread:$0]  %s3, 1024, %s47, [#allocation6], 64, 64, 4
    $region17: #{tpu_custom_call.1} parent=1 // pred_fallthru
      _
    // Predicated region
    $region18: #{tpu_custom_call.1} parent=1 // pred_check
      _
    $region19: #{tpu_custom_call.1} parent=1 // pred_check_branch
      %54 = sbr.rel (0) target = $region21
    $region20: #{tpu_custom_call.1} parent=1 // pred_region
      _
    $region21: #{tpu_custom_call.1} parent=1 // pred_fallthru
      _
    // Predicated region
    $region22: #{tpu_custom_call.1} parent=1 // pred_check
      _
    $region23: #{tpu_custom_call.1} parent=1 // pred_check_branch
      %56 = sbr.rel (0) target = $region25
    $region24: #{tpu_custom_call.1} parent=1 // pred_region
      _
    $region25: #{tpu_custom_call.1} parent=1 // pred_fallthru
      _
    // Predicated region
    $region26: #{tpu_custom_call.1} parent=1 // pred_check
      _
    $region27: #{tpu_custom_call.1} parent=1 // pred_check_branch
      %58 = sbr.rel (0) target = $region29
    $region28: #{tpu_custom_call.1} parent=1 // pred_region
      _
    $region29: #{tpu_custom_call.1} parent=1 // pred_fallthru
      _
    // Predicated region
    $region30: #{tpu_custom_call.1} parent=1 // pred_check
      _
    $region31: #{tpu_custom_call.1} parent=1 // pred_check_branch
      %60 = sbr.rel (0) target = $region33
    $region32: #{tpu_custom_call.1} parent=1 // pred_region
      %61 = dma.done [#allocation3], 512
    $region33: #{tpu_custom_call.1} parent=1 // pred_fallthru
      _
    // Predicated region
    $region34: #{tpu_custom_call.1} parent=1 // pred_check
      _
    $region35: #{tpu_custom_call.1} parent=1 // pred_check_branch
      %63 = sbr.rel (0) target = $region37
    $region36: #{tpu_custom_call.1} parent=1 // pred_region
      %64 = dma.done [#allocation6], 1024
    $region37: #{tpu_custom_call.1} parent=1 // pred_fallthru
      _
    // Predicated region
    $region38: #{tpu_custom_call.1} parent=1 // pred_check
      _
    $region39: #{tpu_custom_call.1} parent=1 // pred_check_branch
      %66 = sbr.rel (0) target = $region41
    $region40: #{tpu_custom_call.1} parent=1 // pred_region
      %67 = dma.done [#allocation6], 1024
    $region41: #{tpu_custom_call.1} parent=1 // pred_fallthru
      _
    %v69 = vld [vmem:[#allocation2] sm:$0xff]
    %v70 = vld [vmem:[#allocation2 + $0x8] sm:$0xff]
    %v71 = vld [vmem:[#allocation2 + $0x10] sm:$0xff]
    %v72 = vld [vmem:[#allocation2 + $0x18] sm:$0xff]
    %v73 = vpack.c.bf16 %v70, %v69
    %v74 = vpack.c.bf16 %v72, %v71
    %v75 = vld [vmem:[#allocation5] sm:$0xf]
    %v76 = vld [vmem:[#allocation5 + $0x4] sm:$0xf]
    %v77 = vld [vmem:[#allocation5 + $0x8] sm:$0xf]
    %v78 = vld [vmem:[#allocation5 + $0xc] sm:$0xf]
    %v79 = vld [vmem:[#allocation5 + $0x10] sm:$0xf]
    %v80 = vld [vmem:[#allocation5 + $0x14] sm:$0xf]
    %v81 = vld [vmem:[#allocation5 + $0x18] sm:$0xf]
    %v82 = vld [vmem:[#allocation5 + $0x1c] sm:$0xf]
    %v83 = vld [vmem:[#allocation5 + $0x20] sm:$0xf]
    %v84 = vld [vmem:[#allocation5 + $0x24] sm:$0xf]
    %v85 = vld [vmem:[#allocation5 + $0x28] sm:$0xf]
    %v86 = vld [vmem:[#allocation5 + $0x2c] sm:$0xf]
    %v87 = vld [vmem:[#allocation5 + $0x30] sm:$0xf]
    %v88 = vld [vmem:[#allocation5 + $0x34] sm:$0xf]
    %v89 = vld [vmem:[#allocation5 + $0x38] sm:$0xf]
    %v90 = vld [vmem:[#allocation5 + $0x3c] sm:$0xf]
    %v91 = vld [vmem:[%s2] sm:$0x1]
    %v93 = vlaneseq
    %v94 = vshrl.u32 %v93, 7
    %v95 = vsub.s32 0, %v94
    %v96 = vrot.slane %v91, %v95
    %v114 = vunpack.c.l.b16 %v75
    %v115 = vunpack.c.l.b16 %v76
    %v116 = vunpack.c.l.b16 %v77
    %v117 = vunpack.c.l.b16 %v78
    %v118 = vunpack.c.l.b16 %v79
    %v119 = vunpack.c.l.b16 %v80
    %v120 = vunpack.c.l.b16 %v81
    %v121 = vunpack.c.l.b16 %v82
    %v122 = vunpack.c.l.b16 %v83
    %v123 = vunpack.c.l.b16 %v84
    %v124 = vunpack.c.l.b16 %v85
    %v125 = vunpack.c.l.b16 %v86
    %v126 = vunpack.c.l.b16 %v87
    %v127 = vunpack.c.l.b16 %v88
    %v128 = vunpack.c.l.b16 %v89
    %v129 = vunpack.c.l.b16 %v90
    %v130 = vpack.c.b16 %v115, %v114
    %v131 = vpack.c.b16 %v117, %v116
    %v132 = vpack.c.b16 %v119, %v118
    %v133 = vpack.c.b16 %v121, %v120
    %v134 = vpack.c.b16 %v123, %v122
    %v135 = vpack.c.b16 %v125, %v124
    %v136 = vpack.c.b16 %v127, %v126
    %v137 = vpack.c.b16 %v129, %v128
    %146 = vmatprep.subr.bf16.mxu0 0
    %147 = vmatpush1.bf16.msra.mxu0 %v130
    %148 = vmatprep.subr.bf16.mxu0 0
    %149 = vmatpush1.bf16.msra.mxu0 %v131
    %150 = vmatprep.subr.bf16.mxu0 0
    %151 = vmatpush1.bf16.msra.mxu0 %v132
    %152 = vmatprep.subr.bf16.mxu0 0
    %153 = vmatpush1.bf16.msra.mxu0 %v133
    %154 = vmatprep.subr.bf16.mxu0 0
    %155 = vmatpush1.bf16.msra.mxu0 %v134
    %156 = vmatprep.subr.bf16.mxu0 0
    %157 = vmatpush1.bf16.msra.mxu0 %v135
    %158 = vmatprep.subr.bf16.mxu0 0
    %159 = vmatpush1.bf16.msra.mxu0 %v136
    %160 = vmatprep.subr.bf16.mxu0 0
    %161 = vmatpush1.bf16.msra.mxu0 %v137
    %162 = vmatprep.subr.bf16.mxu0 0
    %163 = vmatpush1.bf16.msra.mxu0 0
    %164 = vmatprep.subr.bf16.mxu0 0
    %165 = vmatpush1.bf16.msra.mxu0 0
    %166 = vmatprep.subr.bf16.mxu0 0
    %167 = vmatpush1.bf16.msra.mxu0 0
    %168 = vmatprep.subr.bf16.mxu0 0
    %169 = vmatpush1.bf16.msra.mxu0 0
    %170 = vmatprep.subr.bf16.mxu0 0
    %171 = vmatpush1.bf16.msra.mxu0 0
    %172 = vmatprep.subr.bf16.mxu0 0
    %173 = vmatpush1.bf16.msra.mxu0 0
    %174 = vmatprep.subr.bf16.mxu0 0
    %175 = vmatpush1.bf16.msra.mxu0 0
    %176 = vmatprep.subr.bf16.mxu0 0
    %177 = vmatpush1.bf16.msra.mxu0 0
    %178 = vmatprep.mubr.bf16.mxu0 0
    %179 = vmatmul.mubr.bf16.gmra.mrb[0].mxu0 %v73
    %v180 = vpop.f32.mrb[0].mxu0
    %v181 = vadd.f32 %v96, %v180
    %v182 = vpop.f32.mrb[0].mxu0
    %v183 = vpop.f32.mrb[0].mxu0
    %v184 = vadd.f32 %v96, %v183
    %v185 = vpop.f32.mrb[0].mxu0
    %186 = vmatprep.mubr.bf16.mxu0 0
    %187 = vmatmul.mubr.bf16.gmra.mrb[0].mxu0 %v74
    %v188 = vpop.f32.mrb[0].mxu0
    %v189 = vadd.f32 %v96, %v188
    %v190 = vpop.f32.mrb[0].mxu0
    %v191 = vpop.f32.mrb[0].mxu0
    %v192 = vadd.f32 %v96, %v191
    %v193 = vpop.f32.mrb[0].mxu0
    %194 = vdwg.mxu0
    %v195 = vmax.f32 %v181, 0.0
    %v196 = vmax.f32 %v184, 0.0
    %v197 = vmax.f32 %v189, 0.0
    %v198 = vmax.f32 %v192, 0.0
    %v199 = vpack.c.bf16 %v196, %v195
    %v200 = vpack.c.bf16 %v198, %v197
    %v201 = vld [vmem:[#allocation7] sm:$0xf]
    %v202 = vld [vmem:[#allocation7 + $0x4] sm:$0xf]
    %v203 = vld [vmem:[#allocation7 + $0x8] sm:$0xf]
    %v204 = vld [vmem:[#allocation7 + $0xc] sm:$0xf]
    %v205 = vld [vmem:[#allocation7 + $0x10] sm:$0xf]
    %v206 = vld [vmem:[#allocation7 + $0x14] sm:$0xf]
    %v207 = vld [vmem:[#allocation7 + $0x18] sm:$0xf]
    %v208 = vld [vmem:[#allocation7 + $0x1c] sm:$0xf]
    %v209 = vld [vmem:[#allocation7 + $0x20] sm:$0xf]
    %v210 = vld [vmem:[#allocation7 + $0x24] sm:$0xf]
    %v211 = vld [vmem:[#allocation7 + $0x28] sm:$0xf]
    %v212 = vld [vmem:[#allocation7 + $0x2c] sm:$0xf]
    %v213 = vld [vmem:[#allocation7 + $0x30] sm:$0xf]
    %v214 = vld [vmem:[#allocation7 + $0x34] sm:$0xf]
    %v215 = vld [vmem:[#allocation7 + $0x38] sm:$0xf]
    %v216 = vld [vmem:[#allocation7 + $0x3c] sm:$0xf]
    %v233 = vunpack.c.l.b16 %v201
    %v234 = vunpack.c.l.b16 %v202
    %v235 = vunpack.c.l.b16 %v203
    %v236 = vunpack.c.l.b16 %v204
    %v237 = vunpack.c.l.b16 %v205
    %v238 = vunpack.c.l.b16 %v206
    %v239 = vunpack.c.l.b16 %v207
    %v240 = vunpack.c.l.b16 %v208
    %v241 = vunpack.c.l.b16 %v209
    %v242 = vunpack.c.l.b16 %v210
    %v243 = vunpack.c.l.b16 %v211
    %v244 = vunpack.c.l.b16 %v212
    %v245 = vunpack.c.l.b16 %v213
    %v246 = vunpack.c.l.b16 %v214
    %v247 = vunpack.c.l.b16 %v215
    %v248 = vunpack.c.l.b16 %v216
    %v249 = vpack.c.b16 %v234, %v233
    %v250 = vpack.c.b16 %v236, %v235
    %v251 = vpack.c.b16 %v238, %v237
    %v252 = vpack.c.b16 %v240, %v239
    %v253 = vpack.c.b16 %v242, %v241
    %v254 = vpack.c.b16 %v244, %v243
    %v255 = vpack.c.b16 %v246, %v245
    %v256 = vpack.c.b16 %v248, %v247
    %265 = vmatprep.subr.bf16.mxu0 0
    %266 = vmatpush1.bf16.msra.mxu0 %v249
    %267 = vmatprep.subr.bf16.mxu0 0
    %268 = vmatpush1.bf16.msra.mxu0 %v250
    %269 = vmatprep.subr.bf16.mxu0 0
    %270 = vmatpush1.bf16.msra.mxu0 %v251
    %271 = vmatprep.subr.bf16.mxu0 0
    %272 = vmatpush1.bf16.msra.mxu0 %v252
    %273 = vmatprep.subr.bf16.mxu0 0
    %274 = vmatpush1.bf16.msra.mxu0 %v253
    %275 = vmatprep.subr.bf16.mxu0 0
    %276 = vmatpush1.bf16.msra.mxu0 %v254
    %277 = vmatprep.subr.bf16.mxu0 0
    %278 = vmatpush1.bf16.msra.mxu0 %v255
    %279 = vmatprep.subr.bf16.mxu0 0
    %280 = vmatpush1.bf16.msra.mxu0 %v256
    %281 = vmatprep.subr.bf16.mxu0 0
    %282 = vmatpush1.bf16.msra.mxu0 0
    %283 = vmatprep.subr.bf16.mxu0 0
    %284 = vmatpush1.bf16.msra.mxu0 0
    %285 = vmatprep.subr.bf16.mxu0 0
    %286 = vmatpush1.bf16.msra.mxu0 0
    %287 = vmatprep.subr.bf16.mxu0 0
    %288 = vmatpush1.bf16.msra.mxu0 0
    %289 = vmatprep.subr.bf16.mxu0 0
    %290 = vmatpush1.bf16.msra.mxu0 0
    %291 = vmatprep.subr.bf16.mxu0 0
    %292 = vmatpush1.bf16.msra.mxu0 0
    %293 = vmatprep.subr.bf16.mxu0 0
    %294 = vmatpush1.bf16.msra.mxu0 0
    %295 = vmatprep.subr.bf16.mxu0 0
    %296 = vmatpush1.bf16.msra.mxu0 0
    %297 = vmatprep.mubr.bf16.mxu0 0
    %298 = vmatmul.mubr.bf16.gmra.mrb[0].mxu0 %v199
    %v299 = vpop.f32.mrb[0].mxu0
    %v300 = vadd.f32 0.0, %v299
    %v301 = vpop.f32.mrb[0].mxu0
    %v302 = vpop.f32.mrb[0].mxu0
    %v303 = vadd.f32 0.0, %v302
    %v304 = vpop.f32.mrb[0].mxu0
    %305 = vmatprep.mubr.bf16.mxu0 0
    %306 = vmatmul.mubr.bf16.gmra.mrb[0].mxu0 %v200
    %v307 = vpop.f32.mrb[0].mxu0
    %v308 = vadd.f32 0.0, %v307
    %v309 = vpop.f32.mrb[0].mxu0
    %v310 = vpop.f32.mrb[0].mxu0
    %v311 = vadd.f32 0.0, %v310
    %v312 = vpop.f32.mrb[0].mxu0
    %313 = vdwg.mxu0
    %v314 = vadd.f32 %v69, %v300
    %v315 = vadd.f32 %v70, %v303
    %v316 = vadd.f32 %v71, %v308
    %v317 = vadd.f32 %v72, %v311
    %v318 = vld [vmem:[%s4] sm:$0x1]
    %v320 = vlaneseq
    %v321 = vshrl.u32 %v320, 7
    %v322 = vsub.s32 0, %v321
    %v323 = vrot.slane %v318, %v322
    %v325 = vadd.f32 %v314, %v323
    %v326 = vadd.f32 %v315, %v323
    %v327 = vadd.f32 %v316, %v323
    %v328 = vadd.f32 %v317, %v323
    %329 = vadd.xlane.f32.xlu0 %v325
    %v330 = vpop.xlane.xlu0 %329
    %331 = vadd.xlane.f32.xlu0 %v326
    %v332 = vpop.xlane.xlu0 %331
    %333 = vadd.xlane.f32.xlu0 %v327
    %v334 = vpop.xlane.xlu0 %333
    %335 = vadd.xlane.f32.xlu0 %v328
    %v336 = vpop.xlane.xlu0 %335
    %v337 = vrcp.pop 128.0
    %v338 = vmul.f32 %v330, %v337
    %v339 = vmul.f32 %v332, %v337
    %v340 = vmul.f32 %v334, %v337
    %v341 = vmul.f32 %v336, %v337
    %v342 = vsub.f32 %v325, %v338
    %v343 = vsub.f32 %v326, %v339
    %v344 = vsub.f32 %v327, %v340
    %v345 = vsub.f32 %v328, %v341
    %v346 = vmul.f32 %v342, %v342
    %v347 = vmul.f32 %v343, %v343
    %v348 = vmul.f32 %v344, %v344
    %v349 = vmul.f32 %v345, %v345
    %350 = vadd.xlane.f32.xlu0 %v346
    %v351 = vpop.xlane.xlu0 %350
    %352 = vadd.xlane.f32.xlu0 %v347
    %v353 = vpop.xlane.xlu0 %352
    %354 = vadd.xlane.f32.xlu0 %v348
    %v355 = vpop.xlane.xlu0 %354
    %356 = vadd.xlane.f32.xlu0 %v349
    %v357 = vpop.xlane.xlu0 %356
    %v358 = vmul.f32 %v351, %v337
    %v359 = vmul.f32 %v353, %v337
    %v360 = vmul.f32 %v355, %v337
    %v361 = vmul.f32 %v357, %v337
    %v362 = vadd.f32 %v358, 1e-05
    %v363 = vadd.f32 %v359, 1e-05
    %v364 = vadd.f32 %v360, 1e-05
    %v365 = vadd.f32 %v361, 1e-05
    %v366 = vrsqrt.pop %v362
    %v367 = vrsqrt.pop %v363
    %v368 = vrsqrt.pop %v364
    %v369 = vrsqrt.pop %v365
    %v370 = vmul.f32 %v342, %v366
    %v371 = vmul.f32 %v343, %v367
    %v372 = vmul.f32 %v344, %v368
    %v373 = vmul.f32 %v345, %v369
    %v374 = vld [vmem:[%s5] sm:$0x1]
    %v376 = vlaneseq
    %v377 = vshrl.u32 %v376, 7
    %v378 = vsub.s32 0, %v377
    %v379 = vrot.slane %v374, %v378
    %v381 = vmul.f32 %v370, %v379
    %v382 = vmul.f32 %v371, %v379
    %v383 = vmul.f32 %v372, %v379
    %v384 = vmul.f32 %v373, %v379
    %v385 = vld [vmem:[%s6] sm:$0x1]
    %v387 = vlaneseq
    %v388 = vshrl.u32 %v387, 7
    %v389 = vsub.s32 0, %v388
    %v390 = vrot.slane %v385, %v389
    %v392 = vadd.f32 %v381, %v390
    %v393 = vadd.f32 %v382, %v390
    %v394 = vadd.f32 %v383, %v390
    %v395 = vadd.f32 %v384, %v390
    %396 = vst [vmem:[#allocation8] sm:$0xff] %v392
    %397 = vst [vmem:[#allocation8 + $0x8] sm:$0xff] %v393
    %398 = vst [vmem:[#allocation8 + $0x10] sm:$0xff] %v394
    %399 = vst [vmem:[#allocation8 + $0x18] sm:$0xff] %v395
    // Predicated region
    $region42: #{tpu_custom_call.1} parent=1 // pred_check
      _
    $region43: #{tpu_custom_call.1} parent=1 // pred_check_branch
      %401 = sbr.rel (0) target = $region45
    $region44: #{tpu_custom_call.1} parent=1 // pred_region
      %s403 = ssub.s32 512, 512
      %404 = vsyncadd [#allocation4], %s403
      %s405 = sshll.u32 [#allocation8], 4
      %s406 = int_to_ptr.vmem [resolvable:$true] %s405
      %411 = dma.vmem_to_hbm [thread:$0]  %s406, 512, %s7, [#allocation4], 128, 128, 8
    $region45: #{tpu_custom_call.1} parent=1 // pred_fallthru
      _
    // Predicated region
    $region46: #{tpu_custom_call.1} parent=1 // pred_check
      _
    $region47: #{tpu_custom_call.1} parent=1 // pred_check_branch
      %413 = sbr.rel (0) target = $region49
    $region48: #{tpu_custom_call.1} parent=1 // pred_region
      %414 = dma.done [#allocation4], 512
    $region49: #{tpu_custom_call.1} parent=1 // pred_fallthru
      _
    %415 = vsyncpa [#allocation3], 1
    %416 = vsyncpa [#allocation6], 1
    %417 = vsyncpa [#allocation4], 1

</llo_original>
